<compile_context>
chip_gen: v5e
topology: v5e:2x2
jax: 0.10.0
libtpu: 0.0.40
codegen_flags: <defaults>
</compile_context>

<pallas_src>
import jax
import jax.numpy as jnp
from jax.experimental import pallas as pl
from jax.experimental.pallas import tpu as pltpu


def _round_up(x, m):
    return (x + m - 1) // m * m


def _choose_tm(M, K_pad, E_pad, in_bytes=2, out_bytes=4,
               vmem_budget=40 * 1024 * 1024):
    """Pick the M tile size.

    Targets: 512-row tiles (multiple of 256 for the 2x256^2 MXU on v6e/v7x),
    at least 2 blocks when the problem allows (so both v7x TensorCores get
    work), sublane-aligned (multiple of 8), and sized against the smallest
    VMEM budget (v7x: 64 MiB physical per core, keep headroom for the
    double-buffered streams plus the resident weight/bias).
    """
    def vmem_bytes(t):
        return (2 * t * K_pad * in_bytes        # x tile, bf16, double-buffered
                + 2 * K_pad * E_pad * in_bytes  # weight (VMEM-resident, 2 bufs)
                + 2 * E_pad * 4                 # bias
                + 2 * t * E_pad * out_bytes)    # f32 output tile, double-buffered

    if M >= 1024:
        tm = 512
    else:
        tm = max(8, ((M // 2) // 8) * 8)        # >=2 blocks, (8,128)-legal

    while tm > 256 and vmem_bytes(tm) > vmem_budget:
        tm //= 2
    return tm, vmem_bytes(tm)


def _patch_embed_kernel(x_ref, w_ref, b_ref, o_ref):
    # x_ref: (TM, K_pad) bf16 patch rows; w_ref: (K_pad, E_pad) bf16 projection;
    # b_ref: (1, E_pad) f32 bias.  MXU matmul with f32 accumulation; the bias
    # add rides on the VPU (free slot relative to the MXU-bound matmul).
    acc = jnp.dot(x_ref[...], w_ref[...], preferred_element_type=jnp.float32)
    o_ref[...] = (acc + b_ref[...]).astype(o_ref.dtype)


def patch_embed_forward(img, weight, bias, patch_size):
    """img: (V, B, C, H, W); weight: (E, C, ph, pw); bias: (E,)."""
    V, B, C, H, W = img.shape
    E = weight.shape[0]
    ph, pw = patch_size
    gh, gw = H // ph, W // pw
    num_patches = gh * gw

    M = V * B * num_patches
    K = C * ph * pw
    compute_dtype = jnp.bfloat16  # MXU-native; accumulation stays f32 in-kernel

    # --- glue: im2col (non-overlapping patches -> rows), in bf16 to halve the
    # HBM traffic of the transpose.  Per-patch feature order is (C, ph, pw) to
    # match the conv weight flatten.
    # TODO(synk): fuse this gather into the kernel (per-row-strip DMA + in-VMEM
    # relayout) to remove the XLA round-trip; kept in XLA here because the
    # lane-splitting reshape/transpose is a lowering risk for general shapes.
    x = img.astype(compute_dtype).reshape(V, B, C, gh, ph, gw, pw)
    x = x.transpose(0, 1, 3, 5, 2, 4, 6).reshape(M, K)

    w = weight.astype(compute_dtype).reshape(E, K).T          # (K, E)
    b = bias.astype(jnp.float32).reshape(1, E)                # (1, E)

    # --- lane-dense padding: last dims to multiples of 128, rows to TM blocks.
    K_pad = _round_up(K, 128)
    E_pad = _round_up(E, 128)
    TM, vmem_est = _choose_tm(M, K_pad, E_pad)
    M_pad = _round_up(M, TM)

    x = jnp.pad(x, ((0, M_pad - M), (0, K_pad - K)))
    w = jnp.pad(w, ((0, K_pad - K), (0, E_pad - E)))
    b = jnp.pad(b, ((0, 0), (0, E_pad - E)))

    grid = (M_pad // TM,)  # exact (no dropped remainder): M was padded to TM
    vmem_limit = int(min(max(vmem_est * 3 // 2 + (2 << 20), 16 << 20), 48 << 20))

    cost = pl.CostEstimate(
        flops=2 * M * K * E,
        transcendentals=0,
        bytes_accessed=(M_pad * K_pad + K_pad * E_pad) * 2
        + E_pad * 4
        + M_pad * E_pad * 4,
    )

    out = pl.pallas_call(
        _patch_embed_kernel,
        out_shape=jax.ShapeDtypeStruct((M_pad, E_pad), jnp.float32),
        grid_spec=pltpu.PrefetchScalarGridSpec(
            num_scalar_prefetch=0,
            grid=grid,
            in_specs=[
                # patch-row tile, streamed/double-buffered over the M grid axis
                pl.BlockSpec((TM, K_pad), lambda i: (i, 0)),
                # projection weight + bias: constant index_map -> VMEM-resident
                pl.BlockSpec((K_pad, E_pad), lambda i: (0, 0)),
                pl.BlockSpec((1, E_pad), lambda i: (0, 0)),
            ],
            out_specs=pl.BlockSpec((TM, E_pad), lambda i: (i, 0)),
        ),
        compiler_params=pltpu.CompilerParams(
            dimension_semantics=("parallel",),   # shards M blocks across v7x TCs
            vmem_limit_bytes=vmem_limit,
        ),
        cost_estimate=cost,
    )(x, w, b)

    out = out[:M, :E].astype(img.dtype)
    return out.reshape(V, B, num_patches, E)


if __name__ == "__main__":
    # Small shapes consistent with the module: img_size=16, patch_size=4,
    # in_chans=4, embed_dim=32, num_variants=2, batch=2.
    V, B, C, H, W = 2, 2, 4, 16, 16
    ph = pw = 4
    E = 32

    key = jax.random.PRNGKey(0)
    k_img, k_w, k_b = jax.random.split(key, 3)
    img = jax.random.normal(k_img, (V, B, C, H, W), dtype=jnp.float32)
    weight = jax.random.normal(k_w, (E, C, ph, pw), dtype=jnp.float32) * 0.02
    bias = jax.random.normal(k_b, (E,), dtype=jnp.float32) * 0.02

    out = patch_embed_forward(img, weight, bias, (ph, pw))
    out = jax.block_until_ready(out)

    # sanity check against a pure-JAX f32 reference (strided conv == patch
    # matmul); tolerance relaxed for the bf16 operand cast (f32 accumulation
    # in-kernel).
    ref = jax.lax.conv_general_dilated(
        img.reshape(V * B, C, H, W), weight,
        window_strides=(ph, pw), padding="VALID",
        dimension_numbers=("NCHW", "OIHW", "NCHW"),
    ) + bias.reshape(1, E, 1, 1)
    ref = ref.reshape(V, B, E, -1).transpose(0, 1, 3, 2)
    assert out.shape == (V, B, (H // ph) * (W // pw), E)
    assert out.dtype == img.dtype
    assert jnp.allclose(out, ref, atol=2e-2, rtol=2e-2)

    print("KERNEL_OK")
</pallas_src>

<mosaic_0001>
module attributes {stable_mosaic.version = 11 : i64} {
  func.func @_patch_embed_kernel(%arg0: i32, %arg1: memref<32x128xbf16, #tpu.memory_space<vmem>>, %arg2: memref<128x128xbf16, #tpu.memory_space<vmem>>, %arg3: memref<1x128xf32, #tpu.memory_space<vmem>>, %arg4: memref<32x128xf32, #tpu.memory_space<vmem>>) attributes {dimension_semantics = [#tpu.dimension_semantics<parallel>], iteration_bounds = array<i64: 2>, scalar_prefetch = 0 : i64, scratch_operands = 0 : i64, tpu.core_type = #tpu.core_type<tc>, window_params = [{transform_indices = @transform_0, window_bounds = array<i64: 32, 128>}, {pipeline_mode = #tpu.pipeline_mode<synchronous>, transform_indices = @transform_1, window_bounds = array<i64: 128, 128>}, {pipeline_mode = #tpu.pipeline_mode<synchronous>, transform_indices = @transform_2, window_bounds = array<i64: 1, 128>}, {transform_indices = @transform_3, window_bounds = array<i64: 32, 128>}]} {
    %c0 = arith.constant 0 : index
    %c0_0 = arith.constant 0 : index
    %0 = vector.load %arg1[%c0, %c0_0] : memref<32x128xbf16, #tpu.memory_space<vmem>>, vector<32x128xbf16>
    %c0_1 = arith.constant 0 : index
    %c0_2 = arith.constant 0 : index
    %1 = vector.load %arg2[%c0_1, %c0_2] : memref<128x128xbf16, #tpu.memory_space<vmem>>, vector<128x128xbf16>
    %cst = arith.constant dense<0.000000e+00> : vector<32x128xf32>
    %2 = tpu.matmul %0, %1, %cst {dimension_numbers = #tpu.dot_dimension_numbers<[1], [0], [0], [1], [0, 0, 1, 1], [], []>} : vector<32x128xbf16>, vector<128x128xbf16>, vector<32x128xf32> -> vector<32x128xf32>
    %c0_3 = arith.constant 0 : index
    %c0_4 = arith.constant 0 : index
    %3 = vector.load %arg3[%c0_3, %c0_4] : memref<1x128xf32, #tpu.memory_space<vmem>>, vector<1x128xf32>
    %4 = vector.broadcast %3 : vector<1x128xf32> to vector<32x128xf32>
    %5 = arith.addf %2, %4 : vector<32x128xf32>
    %c0_5 = arith.constant 0 : index
    %c0_6 = arith.constant 0 : index
    %6 = vector.load %arg4[%c0_5, %c0_6] : memref<32x128xf32, #tpu.memory_space<vmem>>, vector<32x128xf32>
    tpu.vector_store %arg4[%c0_5, %c0_6], %5 {strides = array<i32>} : memref<32x128xf32, #tpu.memory_space<vmem>>, vector<32x128xf32>,
    return
  }
  func.func @transform_0(%arg0: i32) -> (i32, i32) {
    %c0_i32 = arith.constant 0 : i32
    %c0_i32_0 = arith.constant 0 : i32
    return %arg0, %c0_i32 : i32, i32
  }
  func.func @transform_1(%arg0: i32) -> (i32, i32) {
    %c0_i32 = arith.constant 0 : i32
    %c0_i32_0 = arith.constant 0 : i32
    %c0_i32_1 = arith.constant 0 : i32
    return %c0_i32, %c0_i32_0 : i32, i32
  }
  func.func @transform_2(%arg0: i32) -> (i32, i32) {
    %c0_i32 = arith.constant 0 : i32
    %c0_i32_0 = arith.constant 0 : i32
    %c0_i32_1 = arith.constant 0 : i32
    return %c0_i32, %c0_i32_0 : i32, i32
  }
  func.func @transform_3(%arg0: i32) -> (i32, i32) {
    %c0_i32 = arith.constant 0 : i32
    %c0_i32_0 = arith.constant 0 : i32
    return %arg0, %c0_i32 : i32, i32
  }
}

</mosaic_0001>

<llo_original>
// kernel: tpu_custom_call.1
$region0: #{tpu_custom_call.1}
  #allocation0 [shape = 'u32[]', space=smem, size = 0x4, offset = 0x4, fixed_abs, tag = 'smem constant byte address 0x4 - core index']
  #allocation1 [shape = 'u32[72,128]{1,0:T(1,128)}', space=vmem, size = 0x9000, scoped, tag = 'internal scratch']
  %s0 = inlined_call_operand.hbm [shape: bf16[64,128], index: 0, kind: input, shape index: {}]
  %s1 = inlined_call_operand.hbm [shape: bf16[128,128], index: 1, kind: input, shape index: {}]
  %s2 = inlined_call_operand.vmem [shape: f32[1,128], index: 2, kind: input, shape index: {}]
  %s3 = inlined_call_operand.hbm [shape: f32[64,128], index: 3, kind: output, shape index: {}]
  %s4 = sld [smem:[#allocation0]]
  $region53: #{tpu_custom_call.1} parent=0
    _
  %s6 = ssub.s32 1, %s4
  %s7 = scalar_select 0, %s6, %s4
  $region1: #{tpu_custom_call.1} parent=0
    #allocation2 [shape = 'u8[16384]{0}', space=vmem, size = 0x4000, scoped, tag = 'input window, operand 0']
    #allocation3 [shape = 's32[2]{0}', space=sflag, size = 0x8, scoped, tag = 'scoped memory for tpu_custom_call.1']
    #allocation4 [shape = 's32[2]{0}', space=sflag, size = 0x8, scoped, tag = 'scoped memory for tpu_custom_call.1']
    #allocation5 [shape = 'u8[32768]{0}', space=vmem, size = 0x8000, scoped, tag = 'input window, operand 1, single buffered']
    #allocation6 [shape = 's32[1]{0}', space=sflag, size = 0x4, scoped, tag = 'scoped memory for tpu_custom_call.1']
    #allocation7 [shape = 'u8[32768]{0}', space=vmem, size = 0x8000, scoped, tag = 'output window, operand 0']
    %8 = vsyncpa [#allocation3], 0
    %s9 = scalar_lea.sflag [#allocation3], 1
    %10 = vsyncpa %s9, 0
    %11 = vsyncpa [#allocation6], 0
    %12 = vsyncpa [#allocation4], 0
    %s13 = scalar_lea.sflag [#allocation4], 1
    %14 = vsyncpa %s13, 0
    loop: start=0, step=1, limit=4
    $region2: #{tpu_custom_call.1} parent=1 // loop_pre_header
      _
    $region3: #{tpu_custom_call.1} parent=1 // loop_header
      %s16 = sphi 0, %s20
      %p17 = scmp.ge.s32.totalorder %s16, 4
      %s26 = sphi 0, %s28
      %s29 = sphi 0, %s26
      %s30 = sphi 0, %s29
      %s46 = sphi 0, %s30
      %s50 = sphi 0, %s50
      %s52 = sphi 0, %s50
      %s53 = sphi 0, %s52
      %s67 = sphi 0, %s53
      %s71 = sphi 0, %s71
      %s73 = sphi 0, %s71
      %s74 = sphi 0, %s73
      %s88 = sphi 0, %s74
      %s94 = sphi 0, %s96
      %s97 = sphi 0, %s94
      %s98 = sphi 0, %s97
      %s114 = sphi 0, %s98
    $region4: #{tpu_custom_call.1} parent=1 // loop_header_branch
      %19 = sbr.rel (%p17) target = $region8
    $region5: #{tpu_custom_call.1} parent=1 // loop_body
      %s21 = ssub.s32 %s16, 1
      %s22 = ssub.s32 %s16, 2
      %s23 = sadd.s32 %s16, 1
      %s24 = ssub.s32 %s16, %s23
      %p25 = scmp.eq.s32.totalorder %s24, 0
      %s27 = sadd.s32 %s26, 1
      %s28 = scalar_select %p25, %s26, %s27
      %p31 = pneg %p25
      %p32 = scmp.eq.s32.totalorder %s16, 1
      %p33 = por %p31, %p32
      %p34 = scmp.ne.s32.totalorder %s26, %s29
      %p35 = scmp.eq.s32.totalorder %s16, 0
      %p36 = por %p34, %p35
      %p37 = scmp.ne.s32.totalorder %s26, %s29
      %p38 = scmp.eq.s32.totalorder %s21, 1
      %p39 = por %p37, %p38
      %p40 = scmp.ne.s32.totalorder %s29, %s30
      %p41 = scmp.eq.s32.totalorder %s21, 0
      %p42 = por %p40, %p41
      %p43 = scmp.ne.s32.totalorder %s29, %s30
      %p44 = scmp.eq.s32.totalorder %s22, 1
      %p45 = por %p43, %p44
      %p47 = scmp.ne.s32.totalorder %s30, %s46
      %p48 = scmp.eq.s32.totalorder %s22, 0
      %p49 = por %p47, %p48
      %s51 = sadd.s32 %s50, 1
      %p54 = scmp.eq.s32.totalorder %s16, 1
      %p55 = scmp.ne.s32.totalorder %s50, %s52
      %p56 = scmp.eq.s32.totalorder %s16, 0
      %p57 = por %p55, %p56
      %p58 = scmp.ne.s32.totalorder %s50, %s52
      %p59 = scmp.eq.s32.totalorder %s21, 1
      %p60 = por %p58, %p59
      %p61 = scmp.ne.s32.totalorder %s52, %s53
      %p62 = scmp.eq.s32.totalorder %s21, 0
      %p63 = por %p61, %p62
      %p64 = scmp.ne.s32.totalorder %s52, %s53
      %p65 = scmp.eq.s32.totalorder %s22, 1
      %p66 = por %p64, %p65
      %p68 = scmp.ne.s32.totalorder %s53, %s67
      %p69 = scmp.eq.s32.totalorder %s22, 0
      %p70 = por %p68, %p69
      %s72 = sadd.s32 %s71, 1
      %p75 = scmp.eq.s32.totalorder %s16, 1
      %p76 = scmp.ne.s32.totalorder %s71, %s73
      %p77 = scmp.eq.s32.totalorder %s16, 0
      %p78 = por %p76, %p77
      %p79 = scmp.ne.s32.totalorder %s71, %s73
      %p80 = scmp.eq.s32.totalorder %s21, 1
      %p81 = por %p79, %p80
      %p82 = scmp.ne.s32.totalorder %s73, %s74
      %p83 = scmp.eq.s32.totalorder %s21, 0
      %p84 = por %p82, %p83
      %p85 = scmp.ne.s32.totalorder %s73, %s74
      %p86 = scmp.eq.s32.totalorder %s22, 1
      %p87 = por %p85, %p86
      %p89 = scmp.ne.s32.totalorder %s74, %s88
      %p90 = scmp.eq.s32.totalorder %s22, 0
      %p91 = por %p89, %p90
      %s92 = ssub.s32 %s16, %s23
      %p93 = scmp.eq.s32.totalorder %s92, 0
      %s95 = sadd.s32 %s94, 1
      %s96 = scalar_select %p93, %s94, %s95
      %p99 = pneg %p93
      %p100 = scmp.eq.s32.totalorder %s16, 1
      %p101 = por %p99, %p100
      %p102 = scmp.ne.s32.totalorder %s94, %s97
      %p103 = scmp.eq.s32.totalorder %s16, 0
      %p104 = por %p102, %p103
      %p105 = scmp.ne.s32.totalorder %s94, %s97
      %p106 = scmp.eq.s32.totalorder %s21, 1
      %p107 = por %p105, %p106
      %p108 = scmp.ne.s32.totalorder %s97, %s98
      %p109 = scmp.eq.s32.totalorder %s21, 0
      %p110 = por %p108, %p109
      %p111 = scmp.ne.s32.totalorder %s97, %s98
      %p112 = scmp.eq.s32.totalorder %s22, 1
      %p113 = por %p111, %p112
      %p115 = scmp.ne.s32.totalorder %s98, %s114
      %p116 = scmp.eq.s32.totalorder %s22, 0
      %p117 = por %p115, %p116
      %p118 = scmp.le.s32.totalorder 1, %s16
      %p119 = scmp.lt.s32.totalorder %s16, 3
      %p120 = pnand %p118, %p119
      %p121 = pneg %p120
      // Predicated region
      $region9: #{tpu_custom_call.1} parent=5 // pred_check
        _
      $region10: #{tpu_custom_call.1} parent=5 // pred_check_branch
        %123 = sbr.rel (%p120) target = $region12
      $region11: #{tpu_custom_call.1} parent=5 // pred_region
        %s124 = ssub.s32 %s16, 1
        // Predicated region
        $region13: #{tpu_custom_call.1} parent=11 // pred_check
          %p125 = pneg %p63
        $region14: #{tpu_custom_call.1} parent=11 // pred_check_branch
          %127 = sbr.rel (%p125) target = $region16
        $region15: #{tpu_custom_call.1} parent=11 // pred_region
          %129 = vsyncadd [#allocation6], 0
          %s130 = sshll.u32 %s1, 4
          %s131 = int_to_ptr.hbm [resolvable:$true] %s130
          %s132 = sshll.u32 [#allocation5], 4
          %s133 = int_to_ptr.vmem [resolvable:$true] %s132
          %138 = dma.hbm_to_vmem [thread:$0]  %s131, 1024, %s133, [#allocation6], 64, 64, 4
        $region16: #{tpu_custom_call.1} parent=11 // pred_fallthru
          _
        // Predicated region
        $region17: #{tpu_custom_call.1} parent=11 // pred_check
          %p139 = pneg %p84
        $region18: #{tpu_custom_call.1} parent=11 // pred_check_branch
          %141 = sbr.rel (%p139) target = $region20
        $region19: #{tpu_custom_call.1} parent=11 // pred_region
          _
        $region20: #{tpu_custom_call.1} parent=11 // pred_fallthru
          _
      $region12: #{tpu_custom_call.1} parent=5 // pred_fallthru
        _
      %p142 = scmp.lt.s32.totalorder %s16, 2
      // Predicated region
      $region21: #{tpu_custom_call.1} parent=5 // pred_check
        %p143 = pneg %p142
      $region22: #{tpu_custom_call.1} parent=5 // pred_check_branch
        %145 = sbr.rel (%p143) target = $region24
      $region23: #{tpu_custom_call.1} parent=5 // pred_region
        // Predicated region
        $region25: #{tpu_custom_call.1} parent=23 // pred_check
          %p146 = pneg %p36
        $region26: #{tpu_custom_call.1} parent=23 // pred_check_branch
          %148 = sbr.rel (%p146) target = $region28
        $region27: #{tpu_custom_call.1} parent=23 // pred_region
          %s149 = sand.u32 %s26, 1
          %s150 = scalar_lea.sflag [#allocation3], %s149
          %s151 = sand.u32 %s26, 1
          %s152 = smul.addr %s151, 16
          %s153 = scalar_lea.vmem [#allocation2], %s152
          %s154 = smul.u32 4, %s16
          %156 = vsyncadd %s150, 0
          %s157 = smul.addr %s154, 4
          %s158 = scalar_lea.hbm %s0, %s157
          %s159 = sshll.u32 %s158, 4
          %s160 = int_to_ptr.hbm [resolvable:$true] %s159
          %s161 = sshll.u32 %s153, 4
          %s162 = int_to_ptr.vmem [resolvable:$true] %s161
          %167 = dma.hbm_to_vmem [thread:$0]  %s160, 256, %s162, %s150, 64, 64, 4
        $region28: #{tpu_custom_call.1} parent=23 // pred_fallthru
          _
      $region24: #{tpu_custom_call.1} parent=5 // pred_fallthru
        _
      %p168 = scmp.le.s32.totalorder 1, %s16
      %p169 = scmp.lt.s32.totalorder %s16, 3
      %p170 = pnand %p168, %p169
      %p171 = pneg %p170
      // Predicated region
      $region29: #{tpu_custom_call.1} parent=5 // pred_check
        _
      $region30: #{tpu_custom_call.1} parent=5 // pred_check_branch
        %173 = sbr.rel (%p170) target = $region32
      $region31: #{tpu_custom_call.1} parent=5 // pred_region
        %s174 = ssub.s32 %s16, 1
        %s175 = sand.u32 %s29, 1
        %s176 = scalar_lea.sflag [#allocation3], %s175
        %s177 = sand.u32 %s29, 1
        %s178 = smul.addr %s177, 16
        %s179 = scalar_lea.vmem [#allocation2], %s178
        // Predicated region
        $region33: #{tpu_custom_call.1} parent=31 // pred_check
          %p180 = pneg %p42
        $region34: #{tpu_custom_call.1} parent=31 // pred_check_branch
          %182 = sbr.rel (%p180) target = $region36
        $region35: #{tpu_custom_call.1} parent=31 // pred_region
          %184 = dma.done %s176, 256
        $region36: #{tpu_custom_call.1} parent=31 // pred_fallthru
          _
        // Predicated region
        $region37: #{tpu_custom_call.1} parent=31 // pred_check
          %p185 = pneg %p63
        $region38: #{tpu_custom_call.1} parent=31 // pred_check_branch
          %187 = sbr.rel (%p185) target = $region40
        $region39: #{tpu_custom_call.1} parent=31 // pred_region
          %189 = dma.done [#allocation6], 1024
        $region40: #{tpu_custom_call.1} parent=31 // pred_fallthru
          _
        %s190 = sand.u32 %s29, 1
        %s191 = scalar_lea.sflag [#allocation3], %s190
        %s192 = sand.u32 %s29, 1
        %s193 = smul.addr %s192, 16
        %s194 = scalar_lea.vmem [#allocation2], %s193
        %p195 = pneg %p42
        %p196 = pneg %p39
        %p197 = pneg %p63
        %p198 = pneg %p60
        %p199 = pneg %p84
        %p200 = pneg %p81
        %p201 = pneg %p110
        %p202 = pneg %p107
        %s203 = sand.u32 %s97, 1
        %s204 = scalar_lea.sflag [#allocation4], %s203
        %s205 = sand.u32 %s97, 1
        %s206 = smul.addr %s205, 32
        %s207 = scalar_lea.vmem [#allocation7], %s206
        %s208 = smul.u32 4, %s21
        %s209 = smul.u32 4, %s21
        %v210 = vld [vmem:[%s179] sm:$0xf]
        %v211 = vld [vmem:[%s179 + $0x4] sm:$0xf]
        %v212 = vld [vmem:[%s179 + $0x8] sm:$0xf]
        %v213 = vld [vmem:[%s179 + $0xc] sm:$0xf]
        %v214 = vld [vmem:[#allocation5] sm:$0xf]
        %v215 = vld [vmem:[#allocation5 + $0x4] sm:$0xf]
        %v216 = vld [vmem:[#allocation5 + $0x8] sm:$0xf]
        %v217 = vld [vmem:[#allocation5 + $0xc] sm:$0xf]
        %v218 = vld [vmem:[#allocation5 + $0x10] sm:$0xf]
        %v219 = vld [vmem:[#allocation5 + $0x14] sm:$0xf]
        %v220 = vld [vmem:[#allocation5 + $0x18] sm:$0xf]
        %v221 = vld [vmem:[#allocation5 + $0x1c] sm:$0xf]
        %v222 = vld [vmem:[#allocation5 + $0x20] sm:$0xf]
        %v223 = vld [vmem:[#allocation5 + $0x24] sm:$0xf]
        %v224 = vld [vmem:[#allocation5 + $0x28] sm:$0xf]
        %v225 = vld [vmem:[#allocation5 + $0x2c] sm:$0xf]
        %v226 = vld [vmem:[#allocation5 + $0x30] sm:$0xf]
        %v227 = vld [vmem:[#allocation5 + $0x34] sm:$0xf]
        %v228 = vld [vmem:[#allocation5 + $0x38] sm:$0xf]
        %v229 = vld [vmem:[#allocation5 + $0x3c] sm:$0xf]
        %v230 = vld [vmem:[%s2] sm:$0x1]
        %v232 = vperm.slane %v230, 0
        %v238 = vunpack.c.l.b16 %v210
        %v239 = vunpack.c.l.b16 %v211
        %v240 = vunpack.c.l.b16 %v212
        %v241 = vunpack.c.l.b16 %v213
        %v242 = vpack.c.b16 %v239, %v238
        %v243 = vpack.c.b16 %v241, %v240
        %v262 = vunpack.c.l.b16 %v214
        %v263 = vunpack.c.l.b16 %v215
        %v264 = vunpack.c.l.b16 %v216
        %v265 = vunpack.c.l.b16 %v217
        %v266 = vunpack.c.l.b16 %v218
        %v267 = vunpack.c.l.b16 %v219
        %v268 = vunpack.c.l.b16 %v220
        %v269 = vunpack.c.l.b16 %v221
        %v270 = vunpack.c.l.b16 %v222
        %v271 = vunpack.c.l.b16 %v223
        %v272 = vunpack.c.l.b16 %v224
        %v273 = vunpack.c.l.b16 %v225
        %v274 = vunpack.c.l.b16 %v226
        %v275 = vunpack.c.l.b16 %v227
        %v276 = vunpack.c.l.b16 %v228
        %v277 = vunpack.c.l.b16 %v229
        %v278 = vpack.c.b16 %v263, %v262
        %v279 = vpack.c.b16 %v265, %v264
        %v280 = vpack.c.b16 %v267, %v266
        %v281 = vpack.c.b16 %v269, %v268
        %v282 = vpack.c.b16 %v271, %v270
        %v283 = vpack.c.b16 %v273, %v272
        %v284 = vpack.c.b16 %v275, %v274
        %v285 = vpack.c.b16 %v277, %v276
        %294 = vmatpush.bf16.msra.mxu0 %v285
        %295 = vmatpush.bf16.msra.mxu0 %v284
        %296 = vmatpush.bf16.msra.mxu0 %v283
        %297 = vmatpush.bf16.msra.mxu0 %v282
        %298 = vmatpush.bf16.msra.mxu0 %v281
        %299 = vmatpush.bf16.msra.mxu0 %v280
        %300 = vmatpush.bf16.msra.mxu0 %v279
        %301 = vmatpush.bf16.msra.mxu0 %v278
        %302 = vmatmul.bf16.gmra.mxu0 %v242
        %v303 = vpop.f32.mrf.mxu0
        %v304 = vadd.f32 %v232, %v303
        %v305 = vpop.f32.mrf.mxu0
        %v306 = vadd.f32 %v232, %v305
        %307 = vmatmul.bf16.gmra.mxu0 %v243
        %v308 = vpop.f32.mrf.mxu0
        %v309 = vadd.f32 %v232, %v308
        %v310 = vpop.f32.mrf.mxu0
        %v311 = vadd.f32 %v232, %v310
        %312 = vdwg.mxu0
        %313 = vst [vmem:[%s207] sm:$0xff] %v304
        %314 = vst [vmem:[%s207 + $0x8] sm:$0xff] %v306
        %315 = vst [vmem:[%s207 + $0x10] sm:$0xff] %v309
        %316 = vst [vmem:[%s207 + $0x18] sm:$0xff] %v311
        %s317 = sand.u32 %s97, 1
        %s318 = scalar_lea.sflag [#allocation4], %s317
        %s319 = sand.u32 %s97, 1
        %s320 = smul.addr %s319, 32
        %s321 = scalar_lea.vmem [#allocation7], %s320
        // Predicated region
        $region41: #{tpu_custom_call.1} parent=31 // pred_check
          %p322 = pneg %p107
        $region42: #{tpu_custom_call.1} parent=31 // pred_check_branch
          %324 = sbr.rel (%p322) target = $region44
        $region43: #{tpu_custom_call.1} parent=31 // pred_region
          %s325 = smul.u32 4, %s21
          %327 = vsyncadd %s318, 0
          %s328 = smul.addr %s325, 8
          %s329 = scalar_lea.hbm %s3, %s328
          %s330 = sshll.u32 %s321, 4
          %s331 = int_to_ptr.vmem [resolvable:$true] %s330
          %s332 = sshll.u32 %s329, 4
          %s333 = int_to_ptr.hbm [resolvable:$true] %s332
          %338 = dma.vmem_to_hbm [thread:$0]  %s331, 512, %s333, %s318, 128, 128, 8
        $region44: #{tpu_custom_call.1} parent=31 // pred_fallthru
          _
      $region32: #{tpu_custom_call.1} parent=5 // pred_fallthru
        _
      %p339 = scmp.le.s32.totalorder 2, %s16
      // Predicated region
      $region45: #{tpu_custom_call.1} parent=5 // pred_check
        %p340 = pneg %p339
      $region46: #{tpu_custom_call.1} parent=5 // pred_check_branch
        %342 = sbr.rel (%p340) target = $region48
      $region47: #{tpu_custom_call.1} parent=5 // pred_region
        %s343 = ssub.s32 %s16, 2
        // Predicated region
        $region49: #{tpu_custom_call.1} parent=47 // pred_check
          %p344 = pneg %p113
        $region50: #{tpu_custom_call.1} parent=47 // pred_check_branch
          %346 = sbr.rel (%p344) target = $region52
        $region51: #{tpu_custom_call.1} parent=47 // pred_region
          %s347 = sand.u32 %s98, 1
          %s348 = scalar_lea.sflag [#allocation4], %s347
          %s349 = sand.u32 %s98, 1
          %s350 = smul.addr %s349, 32
          %s351 = scalar_lea.vmem [#allocation7], %s350
          %353 = dma.done %s348, 512
        $region52: #{tpu_custom_call.1} parent=47 // pred_fallthru
          _
      $region48: #{tpu_custom_call.1} parent=5 // pred_fallthru
        _
    $region6: #{tpu_custom_call.1} parent=1 // loop_footer
      %s20 = sadd.s32 1, %s16
    $region7: #{tpu_custom_call.1} parent=1 // loop_footer_branch
      %15 = sbr.rel target = $region3
    $region8: #{tpu_custom_call.1} parent=1 // loop_exit
      _
    %354 = vsyncpa [#allocation3], 1
    %s355 = scalar_lea.sflag [#allocation3], 1
    %356 = vsyncpa %s355, 1
    %357 = vsyncpa [#allocation6], 1
    %358 = vsyncpa [#allocation4], 1
    %s359 = scalar_lea.sflag [#allocation4], 1
    %360 = vsyncpa %s359, 1

</llo_original>
